<compile_context>
chip_gen: v7x
topology: tpu7x:2x2x1
jax: 0.10.0
libtpu: 0.0.40
codegen_flags: <defaults>
</compile_context>

<pallas_src>
import math
import functools

import jax
import jax.numpy as jnp
from jax.experimental import pallas as pl
from jax.experimental.pallas import tpu as pltpu

_EPS = 1e-5
_NEG = -1e30


# ---------------------------------------------------------------------------
# Pallas kernel
# ---------------------------------------------------------------------------
def _input_interface_kernel(
    tok_ref,     # (TB, S, D)   token+pos embeddings (storage dtype, pre-LN)
    mask_ref,    # (TB, S, 1)   additive key-padding mask, f32 (0 valid, -1e30)
    gamma_ref,   # (1, D)       LayerNorm weight, f32
    beta_ref,    # (1, D)       LayerNorm bias, f32
    wsc_ref,     # (D, HG)      folded score weight (Q / Wk / scale folded in)
    bsc_ref,     # (1, HG)      folded score bias, f32
    wval_ref,    # (D, H)       folded per-head pooled-value weight
    bval_ref,    # (1, H)       folded per-head pooled-value bias, f32
    expand_ref,  # (H, HG)      0/1 head -> head*G replication matrix, f32
    hsum_ref,    # (HG, OUTP)   0/1 head-sum + lane-pad matrix, f32
    bom_ref,     # (1, 1)       folded out-proj + membrane bias, f32
    o_ref,       # (TB, OUTP)   membrane potential (lane-dense, OUTP >= 128)
    *,
    hg: int,
):
    tb, s, d = tok_ref.shape

    # ---- token LayerNorm (f32, single-pass variance) ----------------------
    x = tok_ref[...].reshape(tb * s, d).astype(jnp.float32)        # (TB*S, D)
    mu = jnp.mean(x, axis=-1, keepdims=True)
    ms = jnp.mean(x * x, axis=-1, keepdims=True)
    var = ms - mu * mu
    tok_n = (x - mu) * jax.lax.rsqrt(var + _EPS) \
        * gamma_ref[...] + beta_ref[...]                           # (TB*S, D)
    tok_m = tok_n.astype(wsc_ref.dtype)                            # MXU dtype

    # ---- fused MXU matmuls -------------------------------------------------
    # attention scores for every (head, grid-cell) column, Q/scale folded in
    scores = jnp.dot(tok_m, wsc_ref[...],
                     preferred_element_type=jnp.float32) + bsc_ref[...]  # (TB*S, HG)
    # per-head value pooled by the folded out-proj + membrane weights
    vals = jnp.dot(tok_m, wval_ref[...],
                   preferred_element_type=jnp.float32) + bval_ref[...]   # (TB*S, H)
    # broadcast per-head values across the G grid cells (tiny 0/1 matmul)
    vwb = jnp.dot(vals, expand_ref[...],
                  preferred_element_type=jnp.float32)                    # (TB*S, HG)

    # ---- masked softmax over the key axis, per batch element ---------------
    scores = scores.reshape(tb, s, hg) + mask_ref[...]             # (TB, S, HG)
    vwb = vwb.reshape(tb, s, hg)

    m = jnp.max(scores, axis=1, keepdims=True)                     # (TB, 1, HG)
    p = jnp.exp(scores - m)                                        # (TB, S, HG)
    denom = jnp.sum(p, axis=1, keepdims=True)                      # (TB, 1, HG)
    wsum = jnp.sum(p * vwb, axis=1, keepdims=True)                 # (TB, 1, HG)
    contrib = (wsum / denom).reshape(tb, hg)                       # (TB, HG)

    # ---- head reduction + lane padding via constant 0/1 matmul -------------
    logits = jnp.dot(contrib, hsum_ref[...],
                     preferred_element_type=jnp.float32) + bom_ref[...]  # (TB, OUTP)
    o_ref[...] = jnp.tanh(logits)


# ---------------------------------------------------------------------------
# Parameters
# ---------------------------------------------------------------------------
def make_params(key, vocab_size, grid_h, grid_w, embed_dim, max_seq_len):
    ks = jax.random.split(key, 12)
    D = embed_dim
    return {
        "token_embedding": jax.random.normal(ks[0], (vocab_size, D), jnp.float32),
        "position_embedding": jax.random.normal(ks[1], (max_seq_len, D), jnp.float32),
        "grid_position_embedding":
            jax.random.normal(ks[2], (grid_h, grid_w, D), jnp.float32) * 0.02,
        # MultiheadAttention in_proj split into q/k/v, pre-transposed (D, D).
        "wq_t": jax.random.normal(ks[3], (D, D), jnp.float32) * (1.0 / math.sqrt(D)),
        "wk_t": jax.random.normal(ks[4], (D, D), jnp.float32) * (1.0 / math.sqrt(D)),
        "wv_t": jax.random.normal(ks[5], (D, D), jnp.float32) * (1.0 / math.sqrt(D)),
        "bq": jax.random.normal(ks[6], (1, D), jnp.float32) * 0.01,
        "bk": jax.random.normal(ks[7], (1, D), jnp.float32) * 0.01,
        "bv": jax.random.normal(ks[8], (1, D), jnp.float32) * 0.01,
        "wo_t": jax.random.normal(ks[9], (D, D), jnp.float32) * (1.0 / math.sqrt(D)),
        "bo": jnp.zeros((1, D), jnp.float32),
        # membrane_projection: Linear(D, 1), transposed -> (D, 1)
        "wm_t": jax.random.normal(ks[10], (D, 1), jnp.float32) * (1.0 / math.sqrt(D)),
        "bm": jnp.zeros((1, 1), jnp.float32),
        # shared LayerNorm(D) (reused for token and grid embeds, as in PyTorch)
        "gamma": jnp.ones((1, D), jnp.float32),
        "beta": jnp.zeros((1, D), jnp.float32),
    }


def _fold_params(params, grid_h, grid_w, num_heads, out_pad, storage_dtype):
    """Batch-invariant weight folding (exact; all composed ops are linear)."""
    D = params["token_embedding"].shape[-1]
    G = grid_h * grid_w
    H = num_heads
    hd = D // H
    scale = 1.0 / math.sqrt(hd)

    gamma, beta = params["gamma"], params["beta"]

    # Hoisted grid-side work: LayerNorm(grid pos emb) and Q projection.
    ge = params["grid_position_embedding"].reshape(G, D).astype(jnp.float32)
    mu = jnp.mean(ge, axis=-1, keepdims=True)
    var = jnp.mean((ge - mu) ** 2, axis=-1, keepdims=True)
    gn = (ge - mu) * jax.lax.rsqrt(var + _EPS) * gamma + beta
    q = gn @ params["wq_t"] + params["bq"]                            # (G, D)

    # Fold output projection into the membrane projection.
    w_om = params["wo_t"] @ params["wm_t"]                            # (D, 1)
    b_om = params["bo"] @ params["wm_t"] + params["bm"]               # (1, 1)

    # Score weight: w_sc[d, h*G+g] = scale * sum_e wk[d, h*hd+e] * q[g, h*hd+e]
    qh = q.reshape(G, H, hd)
    wk_h = params["wk_t"].reshape(D, H, hd)
    w_sc = scale * jnp.einsum("dhe,ghe->dhg", wk_h, qh).reshape(D, H * G)
    b_sc = scale * jnp.einsum("he,ghe->hg",
                              params["bk"].reshape(H, hd), qh).reshape(1, H * G)

    # De-duplicated pooled-value weight: one column per head (not per head*G).
    w_om_row = w_om.reshape(1, D)
    w_val = (params["wv_t"] * w_om_row).reshape(D, H, hd).sum(-1)     # (D, H)
    b_val = (params["bv"] * w_om_row).reshape(1, H, hd).sum(-1)       # (1, H)

    # Constant 0/1 matrices: head->head*G replication, and head-sum + lane pad.
    expand = jnp.repeat(jnp.eye(H, dtype=jnp.float32), G, axis=1)     # (H, HG)
    hsum = jnp.pad(jnp.tile(jnp.eye(G, dtype=jnp.float32), (H, 1)),
                   ((0, 0), (0, out_pad - G)))                        # (HG, OUTP)

    return {
        "w_sc": w_sc.astype(storage_dtype),
        "b_sc": b_sc.astype(jnp.float32),
        "w_val": w_val.astype(storage_dtype),
        "b_val": b_val.astype(jnp.float32),
        "expand": expand,
        "hsum": hsum,
        "b_om": b_om.astype(jnp.float32),
    }


def _choose_batch_tile(batch, max_tile=8):
    """Largest divisor of `batch` <= max_tile that keeps the grid length >= 2
    (so v7x's two TensorCores both get work via dimension_semantics=parallel)."""
    best = 1
    for tb in range(1, min(batch, max_tile) + 1):
        if batch % tb == 0 and batch // tb >= 2:
            best = tb
    return best


# ---------------------------------------------------------------------------
# Forward wrapper
# ---------------------------------------------------------------------------
def input_interface_forward(params, token_ids, attention_mask=None, *,
                            grid_h, grid_w, num_heads,
                            storage_dtype=jnp.bfloat16, batch_tile=None):
    if token_ids is None or token_ids.size == 0:
        return None

    single_sample = token_ids.ndim == 1
    if single_sample:
        token_ids = token_ids[None, :]
        if attention_mask is not None:
            attention_mask = attention_mask[None, :]

    B, S = token_ids.shape
    D = params["token_embedding"].shape[-1]
    G = grid_h * grid_w
    H = num_heads
    HG = H * G
    OUTP = max(128, ((G + 127) // 128) * 128)   # lane-dense padded output width

    if batch_tile is None:
        batch_tile = _choose_batch_tile(B)
    TB = batch_tile
    assert B % TB == 0, "batch_tile must divide the batch size"
    NB = B // TB

    # Glue: embedding gathers (token + positional); store in bf16 for DMA.
    tok_e = params["token_embedding"][token_ids]                 # (B, S, D)
    pos_e = params["position_embedding"][jnp.arange(S)]          # (S, D)
    combined = (tok_e + pos_e[None, :, :]).astype(storage_dtype)

    # Additive key-padding mask (f32; -1e30 is not bf16-representable).
    if attention_mask is None:
        mask_add = jnp.zeros((B, S, 1), jnp.float32)
    else:
        mask_add = jnp.where(attention_mask.reshape(B, S, 1),
                             0.0, _NEG).astype(jnp.float32)

    fold = _fold_params(params, grid_h, grid_w, num_heads, OUTP, storage_dtype)

    kernel = functools.partial(_input_interface_kernel, hg=HG)
    const = lambda shape: pl.BlockSpec(shape, lambda b: (0,) * len(shape))

    # TODO(synk): at deployment sizes (real D / G), keep D and H*G multiples of
    # 128, mark the constant-index weight specs pipeline_mode=pl.Buffered(1),
    # and re-budget vmem_limit_bytes for v7x's 64 MiB VMEM.
    out = pl.pallas_call(
        kernel,
        out_shape=jax.ShapeDtypeStruct((NB, TB, OUTP), jnp.float32),
        grid_spec=pltpu.PrefetchScalarGridSpec(
            num_scalar_prefetch=0,
            grid=(NB,),
            in_specs=[
                pl.BlockSpec((TB, S, D), lambda b: (b, 0, 0)),   # token+pos embeds
                pl.BlockSpec((TB, S, 1), lambda b: (b, 0, 0)),   # additive mask
                const((1, D)),                                   # gamma
                const((1, D)),                                   # beta
                const((D, HG)),                                  # folded score weight
                const((1, HG)),                                  # folded score bias
                const((D, H)),                                   # folded value weight
                const((1, H)),                                   # folded value bias
                const((H, HG)),                                  # head->head*G expand
                const((HG, OUTP)),                               # head-sum + pad
                const((1, 1)),                                   # folded out bias
            ],
            out_specs=pl.BlockSpec((None, TB, OUTP), lambda b: (b, 0, 0)),
        ),
        compiler_params=pltpu.CompilerParams(
            dimension_semantics=("parallel",),
            vmem_limit_bytes=32 * 1024 * 1024),
    )(combined, mask_add, params["gamma"], params["beta"],
      fold["w_sc"], fold["b_sc"], fold["w_val"], fold["b_val"],
      fold["expand"], fold["hsum"], fold["b_om"])

    external_input = out.reshape(B, OUTP)[:, :G].reshape(B, grid_h, grid_w)
    if single_sample:
        external_input = external_input[0]
    return external_input


# ---------------------------------------------------------------------------
# Pure-JAX reference (mirrors the PyTorch module, no folding, f32)
# ---------------------------------------------------------------------------
def _reference_forward(params, token_ids, attention_mask, *,
                       grid_h, grid_w, num_heads):
    B, S = token_ids.shape
    D = params["token_embedding"].shape[-1]
    G = grid_h * grid_w
    hd = D // num_heads

    def ln(x):
        mu = jnp.mean(x, -1, keepdims=True)
        var = jnp.mean((x - mu) ** 2, -1, keepdims=True)
        return (x - mu) / jnp.sqrt(var + _EPS) * params["gamma"] + params["beta"]

    tok = params["token_embedding"][token_ids] + \
        params["position_embedding"][jnp.arange(S)][None]
    tok_n = ln(tok)                                              # (B, S, D)
    grid_n = ln(params["grid_position_embedding"].reshape(G, D))

    q = grid_n @ params["wq_t"] + params["bq"]                   # (G, D)
    k = tok_n @ params["wk_t"] + params["bk"]                    # (B, S, D)
    v = tok_n @ params["wv_t"] + params["bv"]

    qh = q.reshape(G, num_heads, hd).transpose(1, 0, 2)          # (H, G, hd)
    kh = k.reshape(B, S, num_heads, hd).transpose(0, 2, 1, 3)    # (B, H, S, hd)
    vh = v.reshape(B, S, num_heads, hd).transpose(0, 2, 1, 3)

    scores = jnp.einsum("hgd,bhsd->bhgs", qh, kh) / math.sqrt(hd)
    if attention_mask is not None:
        scores = jnp.where(attention_mask[:, None, None, :], scores, _NEG)
    p = jax.nn.softmax(scores, axis=-1)
    attn = jnp.einsum("bhgs,bhsd->bghd", p, vh).reshape(B, G, D)
    attn = attn @ params["wo_t"] + params["bo"]
    logits = attn @ params["wm_t"] + params["bm"]                # (B, G, 1)
    return jnp.tanh(logits.reshape(B, grid_h, grid_w))


if __name__ == "__main__":
    VOCAB = 100
    GRID_H, GRID_W = 8, 8
    EMBED_DIM = 32
    MAX_SEQ_LEN = 16
    NUM_HEADS = 4
    B, S = 4, 8     # B=4 -> batch tile TB=2, grid length 2 (both v7x TCs busy)

    key = jax.random.PRNGKey(0)
    pkey, tkey = jax.random.split(key)
    params = make_params(pkey, VOCAB, GRID_H, GRID_W, EMBED_DIM, MAX_SEQ_LEN)

    token_ids = jax.random.randint(tkey, (B, S), 0, VOCAB, dtype=jnp.int32)
    # Mask: batch 0/2 fully valid, batch 1 last two padded, batch 3 last four.
    attention_mask = jnp.array(
        [[True] * S,
         [True] * (S - 2) + [False] * 2,
         [True] * S,
         [True] * (S - 4) + [False] * 4], dtype=jnp.bool_)

    ref = _reference_forward(
        params, token_ids, attention_mask,
        grid_h=GRID_H, grid_w=GRID_W, num_heads=NUM_HEADS)

    # 1) f32 storage: the weight folding is algebraically exact -> tight check.
    out_f32 = input_interface_forward(
        params, token_ids, attention_mask,
        grid_h=GRID_H, grid_w=GRID_W, num_heads=NUM_HEADS,
        storage_dtype=jnp.float32)
    out_f32 = jax.block_until_ready(out_f32)
    assert out_f32.shape == (B, GRID_H, GRID_W), out_f32.shape
    assert float(jnp.max(jnp.abs(out_f32 - ref))) < 2e-3

    # 2) bf16 storage (production/perf path): allow bf16-rounding drift.
    out = input_interface_forward(
        params, token_ids, attention_mask,
        grid_h=GRID_H, grid_w=GRID_W, num_heads=NUM_HEADS,
        storage_dtype=jnp.bfloat16)
    out = jax.block_until_ready(out)

    assert out.shape == (B, GRID_H, GRID_W), out.shape
    assert bool(jnp.all(jnp.isfinite(out)))
    assert bool(jnp.all(jnp.abs(out) <= 1.0))          # tanh range
    assert float(jnp.max(jnp.abs(out - ref))) < 5e-2   # bf16 storage drift
    print("KERNEL_OK")
</pallas_src>

<mosaic_0001>
module attributes {stable_mosaic.version = 11 : i64} {
  func.func @_input_interface_kernel(%arg0: i32, %arg1: memref<2x8x32xf32, #tpu.memory_space<vmem>>, %arg2: memref<2x8x1xf32, #tpu.memory_space<vmem>>, %arg3: memref<1x32xf32, #tpu.memory_space<vmem>>, %arg4: memref<1x32xf32, #tpu.memory_space<vmem>>, %arg5: memref<32x256xf32, #tpu.memory_space<vmem>>, %arg6: memref<1x256xf32, #tpu.memory_space<vmem>>, %arg7: memref<32x4xf32, #tpu.memory_space<vmem>>, %arg8: memref<1x4xf32, #tpu.memory_space<vmem>>, %arg9: memref<4x256xf32, #tpu.memory_space<vmem>>, %arg10: memref<256x128xf32, #tpu.memory_space<vmem>>, %arg11: memref<1x1xf32, #tpu.memory_space<vmem>>, %arg12: memref<1x2x128xf32, #tpu.memory_space<vmem>>) attributes {dimension_semantics = [#tpu.dimension_semantics<parallel>], iteration_bounds = array<i64: 2>, scalar_prefetch = 0 : i64, scratch_operands = 0 : i64, tpu.core_type = #tpu.core_type<tc>, window_params = [{transform_indices = @transform_0, window_bounds = array<i64: 2, 8, 32>}, {transform_indices = @transform_1, window_bounds = array<i64: 2, 8, 1>}, {pipeline_mode = #tpu.pipeline_mode<synchronous>, transform_indices = @transform_2, window_bounds = array<i64: 1, 32>}, {pipeline_mode = #tpu.pipeline_mode<synchronous>, transform_indices = @transform_3, window_bounds = array<i64: 1, 32>}, {pipeline_mode = #tpu.pipeline_mode<synchronous>, transform_indices = @transform_4, window_bounds = array<i64: 32, 256>}, {pipeline_mode = #tpu.pipeline_mode<synchronous>, transform_indices = @transform_5, window_bounds = array<i64: 1, 256>}, {pipeline_mode = #tpu.pipeline_mode<synchronous>, transform_indices = @transform_6, window_bounds = array<i64: 32, 4>}, {pipeline_mode = #tpu.pipeline_mode<synchronous>, transform_indices = @transform_7, window_bounds = array<i64: 1, 4>}, {pipeline_mode = #tpu.pipeline_mode<synchronous>, transform_indices = @transform_8, window_bounds = array<i64: 4, 256>}, {pipeline_mode = #tpu.pipeline_mode<synchronous>, transform_indices = @transform_9, window_bounds = array<i64: 256, 128>}, {pipeline_mode = #tpu.pipeline_mode<synchronous>, transform_indices = @transform_10, window_bounds = array<i64: 1, 1>}, {transform_indices = @transform_11, window_bounds = array<i64: 1, 2, 128>}]} {
    %c0 = arith.constant 0 : index
    %c0_0 = arith.constant 0 : index
    %c0_1 = arith.constant 0 : index
    %0 = vector.load %arg1[%c0, %c0_0, %c0_1] : memref<2x8x32xf32, #tpu.memory_space<vmem>>, vector<2x8x32xf32>
    %1 = vector.shape_cast %0 : vector<2x8x32xf32> to vector<16x32xf32>
    %cst = arith.constant dense<0.000000e+00> : vector<16xf32>
    %2 = vector.multi_reduction <add>, %1, %cst [1] : vector<16x32xf32> to vector<16xf32>
    %3 = vector.shape_cast %2 : vector<16xf32> to vector<16x1xf32>
    %cst_2 = arith.constant 3.200000e+01 : f32
    %4 = vector.broadcast %cst_2 : f32 to vector<16x1xf32>
    %5 = arith.divf %3, %4 : vector<16x1xf32>
    %6 = arith.mulf %1, %1 : vector<16x32xf32>
    %cst_3 = arith.constant dense<0.000000e+00> : vector<16xf32>
    %7 = vector.multi_reduction <add>, %6, %cst_3 [1] : vector<16x32xf32> to vector<16xf32>
    %8 = vector.shape_cast %7 : vector<16xf32> to vector<16x1xf32>
    %cst_4 = arith.constant 3.200000e+01 : f32
    %9 = vector.broadcast %cst_4 : f32 to vector<16x1xf32>
    %10 = arith.divf %8, %9 : vector<16x1xf32>
    %11 = arith.mulf %5, %5 : vector<16x1xf32>
    %12 = arith.subf %10, %11 : vector<16x1xf32>
    %13 = vector.broadcast %5 : vector<16x1xf32> to vector<16x32xf32>
    %14 = arith.subf %1, %13 : vector<16x32xf32>
    %cst_5 = arith.constant 9.99999974E-6 : f32
    %15 = vector.broadcast %cst_5 : f32 to vector<16x1xf32>
    %16 = arith.addf %12, %15 : vector<16x1xf32>
    %17 = math.rsqrt %16 : vector<16x1xf32>
    %18 = vector.broadcast %17 : vector<16x1xf32> to vector<16x32xf32>
    %19 = arith.mulf %14, %18 : vector<16x32xf32>
    %c0_6 = arith.constant 0 : index
    %c0_7 = arith.constant 0 : index
    %20 = vector.load %arg3[%c0_6, %c0_7] : memref<1x32xf32, #tpu.memory_space<vmem>>, vector<1x32xf32>
    %21 = vector.broadcast %20 : vector<1x32xf32> to vector<16x32xf32>
    %22 = arith.mulf %19, %21 : vector<16x32xf32>
    %c0_8 = arith.constant 0 : index
    %c0_9 = arith.constant 0 : index
    %23 = vector.load %arg4[%c0_8, %c0_9] : memref<1x32xf32, #tpu.memory_space<vmem>>, vector<1x32xf32>
    %24 = vector.broadcast %23 : vector<1x32xf32> to vector<16x32xf32>
    %25 = arith.addf %22, %24 : vector<16x32xf32>
    %c0_10 = arith.constant 0 : index
    %c0_11 = arith.constant 0 : index
    %26 = vector.load %arg5[%c0_10, %c0_11] : memref<32x256xf32, #tpu.memory_space<vmem>>, vector<32x256xf32>
    %cst_12 = arith.constant dense<0.000000e+00> : vector<16x256xf32>
    %27 = tpu.matmul %25, %26, %cst_12 {dimension_numbers = #tpu.dot_dimension_numbers<[1], [0], [0], [1], [0, 0, 1, 1], [], []>} : vector<16x32xf32>, vector<32x256xf32>, vector<16x256xf32> -> vector<16x256xf32>
    %c0_13 = arith.constant 0 : index
    %c0_14 = arith.constant 0 : index
    %28 = vector.load %arg6[%c0_13, %c0_14] : memref<1x256xf32, #tpu.memory_space<vmem>>, vector<1x256xf32>
    %29 = vector.broadcast %28 : vector<1x256xf32> to vector<16x256xf32>
    %30 = arith.addf %27, %29 : vector<16x256xf32>
    %c0_15 = arith.constant 0 : index
    %c0_16 = arith.constant 0 : index
    %31 = vector.load %arg7[%c0_15, %c0_16] : memref<32x4xf32, #tpu.memory_space<vmem>>, vector<32x4xf32>
    %cst_17 = arith.constant dense<0.000000e+00> : vector<16x4xf32>
    %32 = tpu.matmul %25, %31, %cst_17 {dimension_numbers = #tpu.dot_dimension_numbers<[1], [0], [0], [1], [0, 0, 1, 1], [], []>} : vector<16x32xf32>, vector<32x4xf32>, vector<16x4xf32> -> vector<16x4xf32>
    %c0_18 = arith.constant 0 : index
    %c0_19 = arith.constant 0 : index
    %33 = vector.load %arg8[%c0_18, %c0_19] : memref<1x4xf32, #tpu.memory_space<vmem>>, vector<1x4xf32>
    %34 = vector.broadcast %33 : vector<1x4xf32> to vector<16x4xf32>
    %35 = arith.addf %32, %34 : vector<16x4xf32>
    %c0_20 = arith.constant 0 : index
    %c0_21 = arith.constant 0 : index
    %36 = vector.load %arg9[%c0_20, %c0_21] : memref<4x256xf32, #tpu.memory_space<vmem>>, vector<4x256xf32>
    %cst_22 = arith.constant dense<0.000000e+00> : vector<16x256xf32>
    %37 = tpu.matmul %35, %36, %cst_22 {dimension_numbers = #tpu.dot_dimension_numbers<[1], [0], [0], [1], [0, 0, 1, 1], [], []>} : vector<16x4xf32>, vector<4x256xf32>, vector<16x256xf32> -> vector<16x256xf32>
    %38 = vector.shape_cast %30 : vector<16x256xf32> to vector<2x8x256xf32>
    %c0_23 = arith.constant 0 : index
    %c0_24 = arith.constant 0 : index
    %c0_25 = arith.constant 0 : index
    %39 = vector.load %arg2[%c0_23, %c0_24, %c0_25] : memref<2x8x1xf32, #tpu.memory_space<vmem>>, vector<2x8x1xf32>
    %40 = vector.broadcast %39 : vector<2x8x1xf32> to vector<2x8x256xf32>
    %41 = arith.addf %38, %40 : vector<2x8x256xf32>
    %42 = vector.shape_cast %37 : vector<16x256xf32> to vector<2x8x256xf32>
    %cst_26 = arith.constant dense<0xFF800000> : vector<2x256xf32>
    %43 = vector.multi_reduction <maximumf>, %41, %cst_26 [1] : vector<2x8x256xf32> to vector<2x256xf32>
    %44 = vector.shape_cast %43 : vector<2x256xf32> to vector<2x1x256xf32>
    %45 = vector.broadcast %44 : vector<2x1x256xf32> to vector<2x8x256xf32>
    %46 = arith.subf %41, %45 : vector<2x8x256xf32>
    %47 = math.exp %46 : vector<2x8x256xf32>
    %cst_27 = arith.constant dense<0.000000e+00> : vector<2x256xf32>
    %48 = vector.multi_reduction <add>, %47, %cst_27 [1] : vector<2x8x256xf32> to vector<2x256xf32>
    %49 = vector.shape_cast %48 : vector<2x256xf32> to vector<2x1x256xf32>
    %50 = arith.mulf %47, %42 : vector<2x8x256xf32>
    %cst_28 = arith.constant dense<0.000000e+00> : vector<2x256xf32>
    %51 = vector.multi_reduction <add>, %50, %cst_28 [1] : vector<2x8x256xf32> to vector<2x256xf32>
    %52 = vector.shape_cast %51 : vector<2x256xf32> to vector<2x1x256xf32>
    %53 = arith.divf %52, %49 : vector<2x1x256xf32>
    %54 = vector.shape_cast %53 : vector<2x1x256xf32> to vector<2x256xf32>
    %c0_29 = arith.constant 0 : index
    %c0_30 = arith.constant 0 : index
    %55 = vector.load %arg10[%c0_29, %c0_30] : memref<256x128xf32, #tpu.memory_space<vmem>>, vector<256x128xf32>
    %cst_31 = arith.constant dense<0.000000e+00> : vector<2x128xf32>
    %56 = tpu.matmul %54, %55, %cst_31 {dimension_numbers = #tpu.dot_dimension_numbers<[1], [0], [0], [1], [0, 0, 1, 1], [], []>} : vector<2x256xf32>, vector<256x128xf32>, vector<2x128xf32> -> vector<2x128xf32>
    %c0_32 = arith.constant 0 : index
    %c0_33 = arith.constant 0 : index
    %57 = vector.load %arg11[%c0_32, %c0_33] : memref<1x1xf32, #tpu.memory_space<vmem>>, vector<1x1xf32>
    %58 = vector.broadcast %57 : vector<1x1xf32> to vector<2x128xf32>
    %59 = arith.addf %56, %58 : vector<2x128xf32>
    %60 = math.tanh %59 : vector<2x128xf32>
    %c0_34 = arith.constant 0 : index
    %c0_35 = arith.constant 0 : index
    %c0_36 = arith.constant 0 : index
    %61 = vector.load %arg12[%c0_34, %c0_35, %c0_36] : memref<1x2x128xf32, #tpu.memory_space<vmem>>, vector<1x2x128xf32>
    %62 = vector.shape_cast %61 : vector<1x2x128xf32> to vector<2x128xf32>
    %63 = vector.shape_cast %60 : vector<2x128xf32> to vector<1x2x128xf32>
    tpu.vector_store %arg12[%c0_34, %c0_35, %c0_36], %63 {strides = array<i32>} : memref<1x2x128xf32, #tpu.memory_space<vmem>>, vector<1x2x128xf32>,
    return
  }
  func.func @transform_0(%arg0: i32) -> (i32, i32, i32) {
    %c0_i32 = arith.constant 0 : i32
    %c0_i32_0 = arith.constant 0 : i32
    %c0_i32_1 = arith.constant 0 : i32
    return %arg0, %c0_i32, %c0_i32_0 : i32, i32, i32
  }
  func.func @transform_1(%arg0: i32) -> (i32, i32, i32) {
    %c0_i32 = arith.constant 0 : i32
    %c0_i32_0 = arith.constant 0 : i32
    %c0_i32_1 = arith.constant 0 : i32
    return %arg0, %c0_i32, %c0_i32_0 : i32, i32, i32
  }
  func.func @transform_2(%arg0: i32) -> (i32, i32) {
    %c0_i32 = arith.constant 0 : i32
    %c0_i32_0 = arith.constant 0 : i32
    %c0_i32_1 = arith.constant 0 : i32
    return %c0_i32, %c0_i32_0 : i32, i32
  }
  func.func @transform_3(%arg0: i32) -> (i32, i32) {
    %c0_i32 = arith.constant 0 : i32
    %c0_i32_0 = arith.constant 0 : i32
    %c0_i32_1 = arith.constant 0 : i32
    return %c0_i32, %c0_i32_0 : i32, i32
  }
  func.func @transform_4(%arg0: i32) -> (i32, i32) {
    %c0_i32 = arith.constant 0 : i32
    %c0_i32_0 = arith.constant 0 : i32
    %c0_i32_1 = arith.constant 0 : i32
    return %c0_i32, %c0_i32_0 : i32, i32
  }
  func.func @transform_5(%arg0: i32) -> (i32, i32) {
    %c0_i32 = arith.constant 0 : i32
    %c0_i32_0 = arith.constant 0 : i32
    %c0_i32_1 = arith.constant 0 : i32
    return %c0_i32, %c0_i32_0 : i32, i32
  }
  func.func @transform_6(%arg0: i32) -> (i32, i32) {
    %c0_i32 = arith.constant 0 : i32
    %c0_i32_0 = arith.constant 0 : i32
    %c0_i32_1 = arith.constant 0 : i32
    return %c0_i32, %c0_i32_0 : i32, i32
  }
  func.func @transform_7(%arg0: i32) -> (i32, i32) {
    %c0_i32 = arith.constant 0 : i32
    %c0_i32_0 = arith.constant 0 : i32
    %c0_i32_1 = arith.constant 0 : i32
    return %c0_i32, %c0_i32_0 : i32, i32
  }
  func.func @transform_8(%arg0: i32) -> (i32, i32) {
    %c0_i32 = arith.constant 0 : i32
    %c0_i32_0 = arith.constant 0 : i32
    %c0_i32_1 = arith.constant 0 : i32
    return %c0_i32, %c0_i32_0 : i32, i32
  }
  func.func @transform_9(%arg0: i32) -> (i32, i32) {
    %c0_i32 = arith.constant 0 : i32
    %c0_i32_0 = arith.constant 0 : i32
    %c0_i32_1 = arith.constant 0 : i32
    return %c0_i32, %c0_i32_0 : i32, i32
  }
  func.func @transform_10(%arg0: i32) -> (i32, i32) {
    %c0_i32 = arith.constant 0 : i32
    %c0_i32_0 = arith.constant 0 : i32
    %c0_i32_1 = arith.constant 0 : i32
    return %c0_i32, %c0_i32_0 : i32, i32
  }
  func.func @transform_11(%arg0: i32) -> (i32, i32, i32) {
    %c0_i32 = arith.constant 0 : i32
    %c0_i32_0 = arith.constant 0 : i32
    %c0_i32_1 = arith.constant 0 : i32
    return %arg0, %c0_i32, %c0_i32_0 : i32, i32, i32
  }
}

</mosaic_0001>

<llo_original>
// kernel: tpu_custom_call.1
$region0: #{tpu_custom_call.1}
  #allocation0 [shape = 'u32[]', space=smem, size = 0x4, offset = 0x4, fixed_abs, tag = 'smem constant byte address 0x4 - core index']
  #allocation1 [shape = 'u32[144,128]{1,0:T(1,128)}', space=vmem, size = 0x12000, scoped, tag = 'internal scratch']
  #allocation2 [shape = 'f32[1,1]{1,0:T(1,128)S(1)}', space=vmem, size = 0x200, scoped, tag = 'scoped memory for tpu_custom_call.1']
  %s0 = inlined_call_operand.hbm [shape: f32[4,8,32], index: 0, kind: input, shape index: {}]
  %s1 = inlined_call_operand.vmem [shape: f32[4,8,1], index: 1, kind: input, shape index: {}]
  %s2 = inlined_call_operand.vmem [shape: f32[1,32], index: 2, kind: input, shape index: {}]
  %s3 = inlined_call_operand.vmem [shape: f32[1,32], index: 3, kind: input, shape index: {}]
  %s4 = inlined_call_operand.vmem [shape: f32[32,256], index: 4, kind: input, shape index: {}]
  %s5 = inlined_call_operand.vmem [shape: f32[1,256], index: 5, kind: input, shape index: {}]
  %s6 = inlined_call_operand.vmem [shape: f32[32,4], index: 6, kind: input, shape index: {}]
  %s7 = inlined_call_operand.vmem [shape: f32[1,4], index: 7, kind: input, shape index: {}]
  %s8 = inlined_call_operand.vmem [shape: f32[4,256], index: 8, kind: input, shape index: {}]
  %s9 = inlined_call_operand.hbm [shape: f32[256,128], index: 9, kind: input, shape index: {}]
  %s10 = inlined_call_operand.<no memory space> [shape: f32[1,1], index: 10, kind: input, shape index: {}]
  %s11 = inlined_call_operand.hbm [shape: f32[2,2,128], index: 11, kind: output, shape index: {}]
  %s12 = sld [smem:[#allocation0]]
  $region85: #{tpu_custom_call.1} parent=0
    _
  %s14 = ssub.s32 1, %s12
  %s15 = scalar_select 0, %s14, %s12
  %v16 = vstv %s10
  %17 = vst [vmem:[#allocation2] sm:$0x1] %v16
  $region1: #{tpu_custom_call.1} parent=0
    #allocation3 [shape = 'u8[16384]{0}', space=vmem, size = 0x4000, scoped, tag = 'input window, operand 0']
    #allocation4 [shape = 's32[2]{0}', space=sflag, size = 0x8, scoped, tag = 'scoped memory for tpu_custom_call.1']
    #allocation5 [shape = 's32[2]{0}', space=sflag, size = 0x8, scoped, tag = 'scoped memory for tpu_custom_call.1']
    #allocation6 [shape = 'u8[131072]{0}', space=vmem, size = 0x20000, scoped, tag = 'input window, operand 9, single buffered']
    #allocation7 [shape = 's32[1]{0}', space=sflag, size = 0x4, scoped, tag = 'scoped memory for tpu_custom_call.1']
    #allocation8 [shape = 'u8[2048]{0}', space=vmem, size = 0x800, scoped, tag = 'output window, operand 0']
    %18 = vsyncpa [#allocation4], 0
    %s19 = scalar_lea.sflag [#allocation4], 1
    %20 = vsyncpa %s19, 0
    %21 = vsyncpa [#allocation7], 0
    %22 = vsyncpa [#allocation5], 0
    %s23 = scalar_lea.sflag [#allocation5], 1
    %24 = vsyncpa %s23, 0
    loop: start=0, step=1, limit=4
    $region2: #{tpu_custom_call.1} parent=1 // loop_pre_header
      _
    $region3: #{tpu_custom_call.1} parent=1 // loop_header
      %s26 = sphi 0, %s30
      %p27 = scmp.ge.s32.totalorder %s26, 4
      %s36 = sphi 0, %s38
      %s39 = sphi 0, %s36
      %s40 = sphi 0, %s39
      %s56 = sphi 0, %s40
      %s62 = sphi 0, %s64
      %s65 = sphi 0, %s62
      %s66 = sphi 0, %s65
      %s82 = sphi 0, %s66
      %s86 = sphi 0, %s86
      %s88 = sphi 0, %s86
      %s89 = sphi 0, %s88
      %s103 = sphi 0, %s89
      %s107 = sphi 0, %s107
      %s109 = sphi 0, %s107
      %s110 = sphi 0, %s109
      %s124 = sphi 0, %s110
      %s128 = sphi 0, %s128
      %s130 = sphi 0, %s128
      %s131 = sphi 0, %s130
      %s145 = sphi 0, %s131
      %s149 = sphi 0, %s149
      %s151 = sphi 0, %s149
      %s152 = sphi 0, %s151
      %s166 = sphi 0, %s152
      %s170 = sphi 0, %s170
      %s172 = sphi 0, %s170
      %s173 = sphi 0, %s172
      %s187 = sphi 0, %s173
      %s191 = sphi 0, %s191
      %s193 = sphi 0, %s191
      %s194 = sphi 0, %s193
      %s208 = sphi 0, %s194
      %s212 = sphi 0, %s212
      %s214 = sphi 0, %s212
      %s215 = sphi 0, %s214
      %s229 = sphi 0, %s215
      %s233 = sphi 0, %s233
      %s235 = sphi 0, %s233
      %s236 = sphi 0, %s235
      %s250 = sphi 0, %s236
      %s254 = sphi 0, %s254
      %s256 = sphi 0, %s254
      %s257 = sphi 0, %s256
      %s271 = sphi 0, %s257
      %s277 = sphi 0, %s279
      %s280 = sphi 0, %s277
      %s281 = sphi 0, %s280
      %s297 = sphi 0, %s281
    $region4: #{tpu_custom_call.1} parent=1 // loop_header_branch
      %29 = sbr.rel (%p27) target = $region8
    $region5: #{tpu_custom_call.1} parent=1 // loop_body
      %s31 = ssub.s32 %s26, 1
      %s32 = ssub.s32 %s26, 2
      %s33 = sadd.s32 %s26, 1
      %s34 = ssub.s32 %s26, %s33
      %p35 = scmp.eq.s32.totalorder %s34, 0
      %s37 = sadd.s32 %s36, 1
      %s38 = scalar_select %p35, %s36, %s37
      %p41 = pneg %p35
      %p42 = scmp.eq.s32.totalorder %s26, 1
      %p43 = por %p41, %p42
      %p44 = scmp.ne.s32.totalorder %s36, %s39
      %p45 = scmp.eq.s32.totalorder %s26, 0
      %p46 = por %p44, %p45
      %p47 = scmp.ne.s32.totalorder %s36, %s39
      %p48 = scmp.eq.s32.totalorder %s31, 1
      %p49 = por %p47, %p48
      %p50 = scmp.ne.s32.totalorder %s39, %s40
      %p51 = scmp.eq.s32.totalorder %s31, 0
      %p52 = por %p50, %p51
      %p53 = scmp.ne.s32.totalorder %s39, %s40
      %p54 = scmp.eq.s32.totalorder %s32, 1
      %p55 = por %p53, %p54
      %p57 = scmp.ne.s32.totalorder %s40, %s56
      %p58 = scmp.eq.s32.totalorder %s32, 0
      %p59 = por %p57, %p58
      %s60 = ssub.s32 %s26, %s33
      %p61 = scmp.eq.s32.totalorder %s60, 0
      %s63 = sadd.s32 %s62, 1
      %s64 = scalar_select %p61, %s62, %s63
      %p67 = pneg %p61
      %p68 = scmp.eq.s32.totalorder %s26, 1
      %p69 = por %p67, %p68
      %p70 = scmp.ne.s32.totalorder %s62, %s65
      %p71 = scmp.eq.s32.totalorder %s26, 0
      %p72 = por %p70, %p71
      %p73 = scmp.ne.s32.totalorder %s62, %s65
      %p74 = scmp.eq.s32.totalorder %s31, 1
      %p75 = por %p73, %p74
      %p76 = scmp.ne.s32.totalorder %s65, %s66
      %p77 = scmp.eq.s32.totalorder %s31, 0
      %p78 = por %p76, %p77
      %p79 = scmp.ne.s32.totalorder %s65, %s66
      %p80 = scmp.eq.s32.totalorder %s32, 1
      %p81 = por %p79, %p80
      %p83 = scmp.ne.s32.totalorder %s66, %s82
      %p84 = scmp.eq.s32.totalorder %s32, 0
      %p85 = por %p83, %p84
      %s87 = sadd.s32 %s86, 1
      %p90 = scmp.eq.s32.totalorder %s26, 1
      %p91 = scmp.ne.s32.totalorder %s86, %s88
      %p92 = scmp.eq.s32.totalorder %s26, 0
      %p93 = por %p91, %p92
      %p94 = scmp.ne.s32.totalorder %s86, %s88
      %p95 = scmp.eq.s32.totalorder %s31, 1
      %p96 = por %p94, %p95
      %p97 = scmp.ne.s32.totalorder %s88, %s89
      %p98 = scmp.eq.s32.totalorder %s31, 0
      %p99 = por %p97, %p98
      %p100 = scmp.ne.s32.totalorder %s88, %s89
      %p101 = scmp.eq.s32.totalorder %s32, 1
      %p102 = por %p100, %p101
      %p104 = scmp.ne.s32.totalorder %s89, %s103
      %p105 = scmp.eq.s32.totalorder %s32, 0
      %p106 = por %p104, %p105
      %s108 = sadd.s32 %s107, 1
      %p111 = scmp.eq.s32.totalorder %s26, 1
      %p112 = scmp.ne.s32.totalorder %s107, %s109
      %p113 = scmp.eq.s32.totalorder %s26, 0
      %p114 = por %p112, %p113
      %p115 = scmp.ne.s32.totalorder %s107, %s109
      %p116 = scmp.eq.s32.totalorder %s31, 1
      %p117 = por %p115, %p116
      %p118 = scmp.ne.s32.totalorder %s109, %s110
      %p119 = scmp.eq.s32.totalorder %s31, 0
      %p120 = por %p118, %p119
      %p121 = scmp.ne.s32.totalorder %s109, %s110
      %p122 = scmp.eq.s32.totalorder %s32, 1
      %p123 = por %p121, %p122
      %p125 = scmp.ne.s32.totalorder %s110, %s124
      %p126 = scmp.eq.s32.totalorder %s32, 0
      %p127 = por %p125, %p126
      %s129 = sadd.s32 %s128, 1
      %p132 = scmp.eq.s32.totalorder %s26, 1
      %p133 = scmp.ne.s32.totalorder %s128, %s130
      %p134 = scmp.eq.s32.totalorder %s26, 0
      %p135 = por %p133, %p134
      %p136 = scmp.ne.s32.totalorder %s128, %s130
      %p137 = scmp.eq.s32.totalorder %s31, 1
      %p138 = por %p136, %p137
      %p139 = scmp.ne.s32.totalorder %s130, %s131
      %p140 = scmp.eq.s32.totalorder %s31, 0
      %p141 = por %p139, %p140
      %p142 = scmp.ne.s32.totalorder %s130, %s131
      %p143 = scmp.eq.s32.totalorder %s32, 1
      %p144 = por %p142, %p143
      %p146 = scmp.ne.s32.totalorder %s131, %s145
      %p147 = scmp.eq.s32.totalorder %s32, 0
      %p148 = por %p146, %p147
      %s150 = sadd.s32 %s149, 1
      %p153 = scmp.eq.s32.totalorder %s26, 1
      %p154 = scmp.ne.s32.totalorder %s149, %s151
      %p155 = scmp.eq.s32.totalorder %s26, 0
      %p156 = por %p154, %p155
      %p157 = scmp.ne.s32.totalorder %s149, %s151
      %p158 = scmp.eq.s32.totalorder %s31, 1
      %p159 = por %p157, %p158
      %p160 = scmp.ne.s32.totalorder %s151, %s152
      %p161 = scmp.eq.s32.totalorder %s31, 0
      %p162 = por %p160, %p161
      %p163 = scmp.ne.s32.totalorder %s151, %s152
      %p164 = scmp.eq.s32.totalorder %s32, 1
      %p165 = por %p163, %p164
      %p167 = scmp.ne.s32.totalorder %s152, %s166
      %p168 = scmp.eq.s32.totalorder %s32, 0
      %p169 = por %p167, %p168
      %s171 = sadd.s32 %s170, 1
      %p174 = scmp.eq.s32.totalorder %s26, 1
      %p175 = scmp.ne.s32.totalorder %s170, %s172
      %p176 = scmp.eq.s32.totalorder %s26, 0
      %p177 = por %p175, %p176
      %p178 = scmp.ne.s32.totalorder %s170, %s172
      %p179 = scmp.eq.s32.totalorder %s31, 1
      %p180 = por %p178, %p179
      %p181 = scmp.ne.s32.totalorder %s172, %s173
      %p182 = scmp.eq.s32.totalorder %s31, 0
      %p183 = por %p181, %p182
      %p184 = scmp.ne.s32.totalorder %s172, %s173
      %p185 = scmp.eq.s32.totalorder %s32, 1
      %p186 = por %p184, %p185
      %p188 = scmp.ne.s32.totalorder %s173, %s187
      %p189 = scmp.eq.s32.totalorder %s32, 0
      %p190 = por %p188, %p189
      %s192 = sadd.s32 %s191, 1
      %p195 = scmp.eq.s32.totalorder %s26, 1
      %p196 = scmp.ne.s32.totalorder %s191, %s193
      %p197 = scmp.eq.s32.totalorder %s26, 0
      %p198 = por %p196, %p197
      %p199 = scmp.ne.s32.totalorder %s191, %s193
      %p200 = scmp.eq.s32.totalorder %s31, 1
      %p201 = por %p199, %p200
      %p202 = scmp.ne.s32.totalorder %s193, %s194
      %p203 = scmp.eq.s32.totalorder %s31, 0
      %p204 = por %p202, %p203
      %p205 = scmp.ne.s32.totalorder %s193, %s194
      %p206 = scmp.eq.s32.totalorder %s32, 1
      %p207 = por %p205, %p206
      %p209 = scmp.ne.s32.totalorder %s194, %s208
      %p210 = scmp.eq.s32.totalorder %s32, 0
      %p211 = por %p209, %p210
      %s213 = sadd.s32 %s212, 1
      %p216 = scmp.eq.s32.totalorder %s26, 1
      %p217 = scmp.ne.s32.totalorder %s212, %s214
      %p218 = scmp.eq.s32.totalorder %s26, 0
      %p219 = por %p217, %p218
      %p220 = scmp.ne.s32.totalorder %s212, %s214
      %p221 = scmp.eq.s32.totalorder %s31, 1
      %p222 = por %p220, %p221
      %p223 = scmp.ne.s32.totalorder %s214, %s215
      %p224 = scmp.eq.s32.totalorder %s31, 0
      %p225 = por %p223, %p224
      %p226 = scmp.ne.s32.totalorder %s214, %s215
      %p227 = scmp.eq.s32.totalorder %s32, 1
      %p228 = por %p226, %p227
      %p230 = scmp.ne.s32.totalorder %s215, %s229
      %p231 = scmp.eq.s32.totalorder %s32, 0
      %p232 = por %p230, %p231
      %s234 = sadd.s32 %s233, 1
      %p237 = scmp.eq.s32.totalorder %s26, 1
      %p238 = scmp.ne.s32.totalorder %s233, %s235
      %p239 = scmp.eq.s32.totalorder %s26, 0
      %p240 = por %p238, %p239
      %p241 = scmp.ne.s32.totalorder %s233, %s235
      %p242 = scmp.eq.s32.totalorder %s31, 1
      %p243 = por %p241, %p242
      %p244 = scmp.ne.s32.totalorder %s235, %s236
      %p245 = scmp.eq.s32.totalorder %s31, 0
      %p246 = por %p244, %p245
      %p247 = scmp.ne.s32.totalorder %s235, %s236
      %p248 = scmp.eq.s32.totalorder %s32, 1
      %p249 = por %p247, %p248
      %p251 = scmp.ne.s32.totalorder %s236, %s250
      %p252 = scmp.eq.s32.totalorder %s32, 0
      %p253 = por %p251, %p252
      %s255 = sadd.s32 %s254, 1
      %p258 = scmp.eq.s32.totalorder %s26, 1
      %p259 = scmp.ne.s32.totalorder %s254, %s256
      %p260 = scmp.eq.s32.totalorder %s26, 0
      %p261 = por %p259, %p260
      %p262 = scmp.ne.s32.totalorder %s254, %s256
      %p263 = scmp.eq.s32.totalorder %s31, 1
      %p264 = por %p262, %p263
      %p265 = scmp.ne.s32.totalorder %s256, %s257
      %p266 = scmp.eq.s32.totalorder %s31, 0
      %p267 = por %p265, %p266
      %p268 = scmp.ne.s32.totalorder %s256, %s257
      %p269 = scmp.eq.s32.totalorder %s32, 1
      %p270 = por %p268, %p269
      %p272 = scmp.ne.s32.totalorder %s257, %s271
      %p273 = scmp.eq.s32.totalorder %s32, 0
      %p274 = por %p272, %p273
      %s275 = ssub.s32 %s26, %s33
      %p276 = scmp.eq.s32.totalorder %s275, 0
      %s278 = sadd.s32 %s277, 1
      %s279 = scalar_select %p276, %s277, %s278
      %p282 = pneg %p276
      %p283 = scmp.eq.s32.totalorder %s26, 1
      %p284 = por %p282, %p283
      %p285 = scmp.ne.s32.totalorder %s277, %s280
      %p286 = scmp.eq.s32.totalorder %s26, 0
      %p287 = por %p285, %p286
      %p288 = scmp.ne.s32.totalorder %s277, %s280
      %p289 = scmp.eq.s32.totalorder %s31, 1
      %p290 = por %p288, %p289
      %p291 = scmp.ne.s32.totalorder %s280, %s281
      %p292 = scmp.eq.s32.totalorder %s31, 0
      %p293 = por %p291, %p292
      %p294 = scmp.ne.s32.totalorder %s280, %s281
      %p295 = scmp.eq.s32.totalorder %s32, 1
      %p296 = por %p294, %p295
      %p298 = scmp.ne.s32.totalorder %s281, %s297
      %p299 = scmp.eq.s32.totalorder %s32, 0
      %p300 = por %p298, %p299
      %p301 = scmp.le.s32.totalorder 1, %s26
      %p302 = scmp.lt.s32.totalorder %s26, 3
      %p303 = pnand %p301, %p302
      %p304 = pneg %p303
      // Predicated region
      $region9: #{tpu_custom_call.1} parent=5 // pred_check
        _
      $region10: #{tpu_custom_call.1} parent=5 // pred_check_branch
        %306 = sbr.rel (%p303) target = $region12
      $region11: #{tpu_custom_call.1} parent=5 // pred_region
        %s307 = ssub.s32 %s26, 1
        // Predicated region
        $region13: #{tpu_custom_call.1} parent=11 // pred_check
          %p308 = pneg %p99
        $region14: #{tpu_custom_call.1} parent=11 // pred_check_branch
          %310 = sbr.rel (%p308) target = $region16
        $region15: #{tpu_custom_call.1} parent=11 // pred_region
          _
        $region16: #{tpu_custom_call.1} parent=11 // pred_fallthru
          _
        // Predicated region
        $region17: #{tpu_custom_call.1} parent=11 // pred_check
          %p311 = pneg %p120
        $region18: #{tpu_custom_call.1} parent=11 // pred_check_branch
          %313 = sbr.rel (%p311) target = $region20
        $region19: #{tpu_custom_call.1} parent=11 // pred_region
          _
        $region20: #{tpu_custom_call.1} parent=11 // pred_fallthru
          _
        // Predicated region
        $region21: #{tpu_custom_call.1} parent=11 // pred_check
          %p314 = pneg %p141
        $region22: #{tpu_custom_call.1} parent=11 // pred_check_branch
          %316 = sbr.rel (%p314) target = $region24
        $region23: #{tpu_custom_call.1} parent=11 // pred_region
          _
        $region24: #{tpu_custom_call.1} parent=11 // pred_fallthru
          _
        // Predicated region
        $region25: #{tpu_custom_call.1} parent=11 // pred_check
          %p317 = pneg %p162
        $region26: #{tpu_custom_call.1} parent=11 // pred_check_branch
          %319 = sbr.rel (%p317) target = $region28
        $region27: #{tpu_custom_call.1} parent=11 // pred_region
          _
        $region28: #{tpu_custom_call.1} parent=11 // pred_fallthru
          _
        // Predicated region
        $region29: #{tpu_custom_call.1} parent=11 // pred_check
          %p320 = pneg %p183
        $region30: #{tpu_custom_call.1} parent=11 // pred_check_branch
          %322 = sbr.rel (%p320) target = $region32
        $region31: #{tpu_custom_call.1} parent=11 // pred_region
          _
        $region32: #{tpu_custom_call.1} parent=11 // pred_fallthru
          _
        // Predicated region
        $region33: #{tpu_custom_call.1} parent=11 // pred_check
          %p323 = pneg %p204
        $region34: #{tpu_custom_call.1} parent=11 // pred_check_branch
          %325 = sbr.rel (%p323) target = $region36
        $region35: #{tpu_custom_call.1} parent=11 // pred_region
          _
        $region36: #{tpu_custom_call.1} parent=11 // pred_fallthru
          _
        // Predicated region
        $region37: #{tpu_custom_call.1} parent=11 // pred_check
          %p326 = pneg %p225
        $region38: #{tpu_custom_call.1} parent=11 // pred_check_branch
          %328 = sbr.rel (%p326) target = $region40
        $region39: #{tpu_custom_call.1} parent=11 // pred_region
          _
        $region40: #{tpu_custom_call.1} parent=11 // pred_fallthru
          _
        // Predicated region
        $region41: #{tpu_custom_call.1} parent=11 // pred_check
          %p329 = pneg %p246
        $region42: #{tpu_custom_call.1} parent=11 // pred_check_branch
          %331 = sbr.rel (%p329) target = $region44
        $region43: #{tpu_custom_call.1} parent=11 // pred_region
          %s333 = ssub.s32 4096, 4096
          %334 = vsyncadd [#allocation7], %s333
          %s335 = sshll.u32 [#allocation6], 4
          %s336 = int_to_ptr.vmem [resolvable:$true] %s335
          %341 = dma.hbm_to_vmem [thread:$0]  %s9, 4096, %s336, [#allocation7], 128, 128, 8
        $region44: #{tpu_custom_call.1} parent=11 // pred_fallthru
          _
        // Predicated region
        $region45: #{tpu_custom_call.1} parent=11 // pred_check
          %p342 = pneg %p267
        $region46: #{tpu_custom_call.1} parent=11 // pred_check_branch
          %344 = sbr.rel (%p342) target = $region48
        $region47: #{tpu_custom_call.1} parent=11 // pred_region
          _
        $region48: #{tpu_custom_call.1} parent=11 // pred_fallthru
          _
      $region12: #{tpu_custom_call.1} parent=5 // pred_fallthru
        _
      %p345 = scmp.lt.s32.totalorder %s26, 2
      // Predicated region
      $region49: #{tpu_custom_call.1} parent=5 // pred_check
        %p346 = pneg %p345
      $region50: #{tpu_custom_call.1} parent=5 // pred_check_branch
        %348 = sbr.rel (%p346) target = $region52
      $region51: #{tpu_custom_call.1} parent=5 // pred_region
        // Predicated region
        $region53: #{tpu_custom_call.1} parent=51 // pred_check
          %p349 = pneg %p46
        $region54: #{tpu_custom_call.1} parent=51 // pred_check_branch
          %351 = sbr.rel (%p349) target = $region56
        $region55: #{tpu_custom_call.1} parent=51 // pred_region
          %s352 = sand.u32 %s36, 1
          %s353 = scalar_lea.sflag [#allocation4], %s352
          %s354 = sand.u32 %s36, 1
          %s355 = smul.addr %s354, 16
          %s356 = scalar_lea.vmem [#allocation3], %s355
          %s357 = smul.u32 2, %s26
          %s359 = ssub.s32 256, 256
          %360 = vsyncadd %s353, %s359
          %s361 = smul.addr %s357, 128
          %s362 = scalar_lea.hbm %s0, %s361
          %s363 = sshll.u32 %s356, 4
          %s364 = int_to_ptr.vmem [resolvable:$true] %s363
          %369 = dma.hbm_to_vmem [thread:$0]  %s362, 256, %s364, %s353, 128, 128, 8
        $region56: #{tpu_custom_call.1} parent=51 // pred_fallthru
          _
        // Predicated region
        $region57: #{tpu_custom_call.1} parent=51 // pred_check
          %p370 = pneg %p72
        $region58: #{tpu_custom_call.1} parent=51 // pred_check_branch
          %372 = sbr.rel (%p370) target = $region60
        $region59: #{tpu_custom_call.1} parent=51 // pred_region
          %s373 = smul.u32 2, %s26
          %p374 = scmp.lt.s32.totalorder %s373, 3
          %s375 = scalar_select %p374, %s373, 3
          %s376 = smul.addr %s375, 8
          %s377 = scalar_lea.vmem %s1, %s376
          %s378 = smul.u32 2, %s26
        $region60: #{tpu_custom_call.1} parent=51 // pred_fallthru
          _
      $region52: #{tpu_custom_call.1} parent=5 // pred_fallthru
        _
      %p379 = scmp.le.s32.totalorder 1, %s26
      %p380 = scmp.lt.s32.totalorder %s26, 3
      %p381 = pnand %p379, %p380
      %p382 = pneg %p381
      // Predicated region
      $region61: #{tpu_custom_call.1} parent=5 // pred_check
        _
      $region62: #{tpu_custom_call.1} parent=5 // pred_check_branch
        %384 = sbr.rel (%p381) target = $region64
      $region63: #{tpu_custom_call.1} parent=5 // pred_region
        %s385 = ssub.s32 %s26, 1
        %s386 = sand.u32 %s39, 1
        %s387 = scalar_lea.sflag [#allocation4], %s386
        %s388 = sand.u32 %s39, 1
        %s389 = smul.addr %s388, 16
        %s390 = scalar_lea.vmem [#allocation3], %s389
        // Predicated region
        $region65: #{tpu_custom_call.1} parent=63 // pred_check
          %p391 = pneg %p52
        $region66: #{tpu_custom_call.1} parent=63 // pred_check_branch
          %393 = sbr.rel (%p391) target = $region68
        $region67: #{tpu_custom_call.1} parent=63 // pred_region
          %394 = dma.done %s387, 256
        $region68: #{tpu_custom_call.1} parent=63 // pred_fallthru
          _
        // Predicated region
        $region69: #{tpu_custom_call.1} parent=63 // pred_check
          %p395 = pneg %p246
        $region70: #{tpu_custom_call.1} parent=63 // pred_check_branch
          %397 = sbr.rel (%p395) target = $region72
        $region71: #{tpu_custom_call.1} parent=63 // pred_region
          %398 = dma.done [#allocation7], 4096
        $region72: #{tpu_custom_call.1} parent=63 // pred_fallthru
          _
        %s399 = sand.u32 %s39, 1
        %s400 = scalar_lea.sflag [#allocation4], %s399
        %s401 = sand.u32 %s39, 1
        %s402 = smul.addr %s401, 16
        %s403 = scalar_lea.vmem [#allocation3], %s402
        %p404 = pneg %p52
        %p405 = pneg %p49
        %s406 = smul.u32 2, %s31
        %p407 = scmp.lt.s32.totalorder %s406, 3
        %s408 = scalar_select %p407, %s406, 3
        %s409 = smul.addr %s408, 8
        %s410 = scalar_lea.vmem %s1, %s409
        %p411 = pneg %p78
        %p412 = pneg %p75
        %p413 = pneg %p99
        %p414 = pneg %p96
        %p415 = pneg %p120
        %p416 = pneg %p117
        %p417 = pneg %p141
        %p418 = pneg %p138
        %p419 = pneg %p162
        %p420 = pneg %p159
        %p421 = pneg %p183
        %p422 = pneg %p180
        %p423 = pneg %p204
        %p424 = pneg %p201
        %p425 = pneg %p225
        %p426 = pneg %p222
        %p427 = pneg %p246
        %p428 = pneg %p243
        %p429 = pneg %p267
        %p430 = pneg %p264
        %p431 = pneg %p293
        %p432 = pneg %p290
        %s433 = sand.u32 %s280, 1
        %s434 = scalar_lea.sflag [#allocation5], %s433
        %s435 = sand.u32 %s280, 1
        %s436 = smul.addr %s435, 2
        %s437 = scalar_lea.vmem [#allocation8], %s436
        %s438 = smul.u32 2, %s31
        %s439 = smul.u32 2, %s31
        %p440 = scmp.lt.s32.totalorder %s439, 3
        %s441 = scalar_select %p440, %s439, 3
        %s442 = smul.addr %s441, 8
        %s443 = scalar_lea.vmem %s1, %s442
        %s444 = smul.u32 2, %s31
        %v445 = vld [vmem:[%s390] sm:$0xff]
        %v446 = vld [vmem:[%s390 + $0x8] sm:$0xff]
        %vm447 = vcmask 261120
        %v448 = vsel %vm447, %v445, 0.0
        %449 = vadd.xlane.f32.xlu0 %v448
        %v450 = vpop.xlane.xlu0 %449
        %v451 = vsel %vm447, %v446, 0.0
        %452 = vadd.xlane.f32.xlu0 %v451
        %v453 = vpop.xlane.xlu0 %452
        %v454 = vrcp.pop 32.0
        %v455 = vmul.f32 %v450, %v454
        %v456 = vmul.f32 %v453, %v454
        %v457 = vmul.f32 %v445, %v445
        %v458 = vmul.f32 %v446, %v446
        %v459 = vsel %vm447, %v457, 0.0
        %460 = vadd.xlane.f32.xlu0 %v459
        %v461 = vpop.xlane.xlu0 %460
        %v462 = vsel %vm447, %v458, 0.0
        %463 = vadd.xlane.f32.xlu0 %v462
        %v464 = vpop.xlane.xlu0 %463
        %v465 = vmul.f32 %v461, %v454
        %v466 = vmul.f32 %v464, %v454
        %v467 = vmul.f32 %v455, %v455
        %v468 = vmul.f32 %v456, %v456
        %v469 = vsub.f32 %v465, %v467
        %v470 = vsub.f32 %v466, %v468
        %v471 = vsub.f32 %v445, %v455
        %v472 = vsub.f32 %v446, %v456
        %v473 = vadd.f32 %v469, 1e-05
        %v474 = vadd.f32 %v470, 1e-05
        %v475 = vrsqrt.pop %v473
        %v476 = vrsqrt.pop %v474
        %v477 = vmul.f32 %v471, %v475
        %v478 = vmul.f32 %v472, %v476
        %v479 = vld [vmem:[%s2] sm:$0x1]
        %v481 = vlaneseq
        %v482 = vshrl.u32 %v481, 7
        %v483 = vsub.s32 0, %v482
        %v484 = vrot.slane %v479, %v483
        %v486 = vmul.f32 %v477, %v484
        %v487 = vmul.f32 %v478, %v484
        %v488 = vld [vmem:[%s3] sm:$0x1]
        %v490 = vlaneseq
        %v491 = vshrl.u32 %v490, 7
        %v492 = vsub.s32 0, %v491
        %v493 = vrot.slane %v488, %v492
        %v495 = vadd.f32 %v486, %v493
        %v496 = vadd.f32 %v487, %v493
        %v497 = vld [vmem:[%s4] sm:$0xff]
        %v498 = vld [vmem:[%s4 + $0x8] sm:$0xff]
        %v499 = vld [vmem:[%s4 + $0x10] sm:$0xff]
        %v500 = vld [vmem:[%s4 + $0x18] sm:$0xff]
        %v501 = vld [vmem:[%s4 + $0x20] sm:$0xff]
        %v502 = vld [vmem:[%s4 + $0x28] sm:$0xff]
        %v503 = vld [vmem:[%s4 + $0x30] sm:$0xff]
        %v504 = vld [vmem:[%s4 + $0x38] sm:$0xff]
        %v505 = vld [vmem:[%s5] sm:$0x3]
        %v507 = vlaneseq
        %v508 = vshrl.u32 %v507, 7
        %v509 = vsub.s32 0, %v508
        %v510 = vrot.slane %v505, %v509
        %v511 = vlaneseq
        %v512 = vshrl.u32 %v511, 7
        %v513 = vsub.s32 1, %v512
        %v514 = vrot.slane %v505, %v513
        %v518 = vsel %vm447, %v495, 0
        %v521 = vsel %vm447, %v496, 0
        %523 = vmatprep.subr.mxu0 %v498
        %524 = vmatpush1.msra.mxu0 %v497
        %525 = vmatprep.subr.mxu0 %v500
        %526 = vmatpush1.msra.mxu0 %v499
        %527 = vmatprep.subr.mxu0 %v502
        %528 = vmatpush1.msra.mxu0 %v501
        %529 = vmatprep.subr.mxu0 %v504
        %530 = vmatpush1.msra.mxu0 %v503
        %531 = vmatprep.subr.mxu0 0.0
        %532 = vmatpush1.msra.mxu0 0.0
        %533 = vmatprep.subr.mxu0 0.0
        %534 = vmatpush1.msra.mxu0 0.0
        %535 = vmatprep.subr.mxu0 0.0
        %536 = vmatpush1.msra.mxu0 0.0
        %537 = vmatprep.subr.mxu0 0.0
        %538 = vmatpush1.msra.mxu0 0.0
        %539 = vmatprep.subr.mxu0 0.0
        %540 = vmatpush1.msra.mxu0 0.0
        %541 = vmatprep.subr.mxu0 0.0
        %542 = vmatpush1.msra.mxu0 0.0
        %543 = vmatprep.subr.mxu0 0.0
        %544 = vmatpush1.msra.mxu0 0.0
        %545 = vmatprep.subr.mxu0 0.0
        %546 = vmatpush1.msra.mxu0 0.0
        %547 = vmatprep.subr.mxu0 0.0
        %548 = vmatpush1.msra.mxu0 0.0
        %549 = vmatprep.subr.mxu0 0.0
        %550 = vmatpush1.msra.mxu0 0.0
        %551 = vmatprep.subr.mxu0 0.0
        %552 = vmatpush1.msra.mxu0 0.0
        %553 = vmatprep.subr.mxu0 0.0
        %554 = vmatpush1.msra.mxu0 0.0
        %555 = vmatprep.subr.mxu0 0.0
        %556 = vmatpush1.msra.mxu0 0.0
        %557 = vmatprep.subr.mxu0 0.0
        %558 = vmatpush1.msra.mxu0 0.0
        %559 = vmatprep.subr.mxu0 0.0
        %560 = vmatpush1.msra.mxu0 0.0
        %561 = vmatprep.subr.mxu0 0.0
        %562 = vmatpush1.msra.mxu0 0.0
        %563 = vmatprep.subr.mxu0 0.0
        %564 = vmatpush1.msra.mxu0 0.0
        %565 = vmatprep.subr.mxu0 0.0
        %566 = vmatpush1.msra.mxu0 0.0
        %567 = vmatprep.subr.mxu0 0.0
        %568 = vmatpush1.msra.mxu0 0.0
        %569 = vmatprep.subr.mxu0 0.0
        %570 = vmatpush1.msra.mxu0 0.0
        %571 = vmatprep.subr.mxu0 0.0
        %572 = vmatpush1.msra.mxu0 0.0
        %573 = vmatprep.subr.mxu0 0.0
        %574 = vmatpush1.msra.mxu0 0.0
        %575 = vmatprep.subr.mxu0 0.0
        %576 = vmatpush1.msra.mxu0 0.0
        %577 = vmatprep.subr.mxu0 0.0
        %578 = vmatpush1.msra.mxu0 0.0
        %579 = vmatprep.subr.mxu0 0.0
        %580 = vmatpush1.msra.mxu0 0.0
        %581 = vmatprep.subr.mxu0 0.0
        %582 = vmatpush1.msra.mxu0 0.0
        %583 = vmatprep.subr.mxu0 0.0
        %584 = vmatpush1.msra.mxu0 0.0
        %585 = vmatprep.subr.mxu0 0.0
        %586 = vmatpush1.msra.mxu0 0.0
        %587 = vmatprep.mubr.f32.mxu0 0.0
        %588 = vmatmul.mubr.f32.gmra.mrb[0].mxu0 %v518
        %v589 = vpop.f32.mrb[0].mxu0
        %v590 = vadd.f32 %v510, %v589
        %v591 = vpop.f32.mrb[0].mxu0
        %v592 = vadd.f32 %v514, %v591
        %593 = vmatprep.mubr.f32.mxu0 0.0
        %594 = vmatmul.mubr.f32.gmra.mrb[0].mxu0 %v521
        %v595 = vpop.f32.mrb[0].mxu0
        %v596 = vadd.f32 %v510, %v595
        %v597 = vpop.f32.mrb[0].mxu0
        %v598 = vadd.f32 %v514, %v597
        %599 = vdwg.mxu0
        %v600 = vld [vmem:[%s6] sm:$0xff]
        %v601 = vld [vmem:[%s6 + $0x8] sm:$0xff]
        %v602 = vld [vmem:[%s6 + $0x10] sm:$0xff]
        %v603 = vld [vmem:[%s6 + $0x18] sm:$0xff]
        %v604 = vld [vmem:[%s7] sm:$0x1]
        %v606 = vlaneseq
        %v607 = vshrl.u32 %v606, 7
        %v608 = vsub.s32 0, %v607
        %v609 = vrot.slane %v604, %v608
        %611 = vmatprep.subr.mxu0 0.0
        %612 = vmatpush1.msra.mxu0 %v600
        %613 = vmatprep.subr.mxu0 0.0
        %614 = vmatpush1.msra.mxu0 %v601
        %615 = vmatprep.subr.mxu0 0.0
        %616 = vmatpush1.msra.mxu0 %v602
        %617 = vmatprep.subr.mxu0 0.0
        %618 = vmatpush1.msra.mxu0 %v603
        %619 = vmatprep.subr.mxu0 0.0
        %620 = vmatpush1.msra.mxu0 0.0
        %621 = vmatprep.subr.mxu0 0.0
        %622 = vmatpush1.msra.mxu0 0.0
        %623 = vmatprep.subr.mxu0 0.0
        %624 = vmatpush1.msra.mxu0 0.0
        %625 = vmatprep.subr.mxu0 0.0
        %626 = vmatpush1.msra.mxu0 0.0
        %627 = vmatprep.subr.mxu0 0.0
        %628 = vmatpush1.msra.mxu0 0.0
        %629 = vmatprep.subr.mxu0 0.0
        %630 = vmatpush1.msra.mxu0 0.0
        %631 = vmatprep.subr.mxu0 0.0
        %632 = vmatpush1.msra.mxu0 0.0
        %633 = vmatprep.subr.mxu0 0.0
        %634 = vmatpush1.msra.mxu0 0.0
        %635 = vmatprep.subr.mxu0 0.0
        %636 = vmatpush1.msra.mxu0 0.0
        %637 = vmatprep.subr.mxu0 0.0
        %638 = vmatpush1.msra.mxu0 0.0
        %639 = vmatprep.subr.mxu0 0.0
        %640 = vmatpush1.msra.mxu0 0.0
        %641 = vmatprep.subr.mxu0 0.0
        %642 = vmatpush1.msra.mxu0 0.0
        %643 = vmatprep.subr.mxu0 0.0
        %644 = vmatpush1.msra.mxu0 0.0
        %645 = vmatprep.subr.mxu0 0.0
        %646 = vmatpush1.msra.mxu0 0.0
        %647 = vmatprep.subr.mxu0 0.0
        %648 = vmatpush1.msra.mxu0 0.0
        %649 = vmatprep.subr.mxu0 0.0
        %650 = vmatpush1.msra.mxu0 0.0
        %651 = vmatprep.subr.mxu0 0.0
        %652 = vmatpush1.msra.mxu0 0.0
        %653 = vmatprep.subr.mxu0 0.0
        %654 = vmatpush1.msra.mxu0 0.0
        %655 = vmatprep.subr.mxu0 0.0
        %656 = vmatpush1.msra.mxu0 0.0
        %657 = vmatprep.subr.mxu0 0.0
        %658 = vmatpush1.msra.mxu0 0.0
        %659 = vmatprep.subr.mxu0 0.0
        %660 = vmatpush1.msra.mxu0 0.0
        %661 = vmatprep.subr.mxu0 0.0
        %662 = vmatpush1.msra.mxu0 0.0
        %663 = vmatprep.subr.mxu0 0.0
        %664 = vmatpush1.msra.mxu0 0.0
        %665 = vmatprep.subr.mxu0 0.0
        %666 = vmatpush1.msra.mxu0 0.0
        %667 = vmatprep.subr.mxu0 0.0
        %668 = vmatpush1.msra.mxu0 0.0
        %669 = vmatprep.subr.mxu0 0.0
        %670 = vmatpush1.msra.mxu0 0.0
        %671 = vmatprep.subr.mxu0 0.0
        %672 = vmatpush1.msra.mxu0 0.0
        %673 = vmatprep.subr.mxu0 0.0
        %674 = vmatpush1.msra.mxu0 0.0
        %675 = vmatprep.mubr.f32.mxu0 0.0
        %676 = vmatmul.mubr.f32.gmra.mrb[0].mxu0 %v518
        %v677 = vpop.f32.mrb[0].mxu0
        %v678 = vadd.f32 %v609, %v677
        %v679 = vpop.f32.mrb[0].mxu0
        %680 = vmatprep.mubr.f32.mxu0 0.0
        %681 = vmatmul.mubr.f32.gmra.mrb[0].mxu0 %v521
        %v682 = vpop.f32.mrb[0].mxu0
        %v683 = vadd.f32 %v609, %v682
        %v684 = vpop.f32.mrb[0].mxu0
        %685 = vdwg.mxu0
        %v686 = vld [vmem:[%s8] sm:$0xff]
        %v688 = vcombine.high %v686, %v686
        %vm689 = vcmask 31744
        %v691 = vsel %vm689, %v678, 0
        %v694 = vsel %vm689, %v683, 0
        %vm696 = vcmask 1043456
        %v697 = vsel %vm696, %v686, 0
        %v699 = vsel %vm696, %v688, 0
        %701 = vmatprep.subr.mxu0 %v699
        %702 = vmatpush1.msra.mxu0 %v697
        %703 = vmatprep.subr.mxu0 0.0
        %704 = vmatpush1.msra.mxu0 0.0
        %705 = vmatprep.subr.mxu0 0.0
        %706 = vmatpush1.msra.mxu0 0.0
        %707 = vmatprep.subr.mxu0 0.0
        %708 = vmatpush1.msra.mxu0 0.0
        %709 = vmatprep.subr.mxu0 0.0
        %710 = vmatpush1.msra.mxu0 0.0
        %711 = vmatprep.subr.mxu0 0.0
        %712 = vmatpush1.msra.mxu0 0.0
        %713 = vmatprep.subr.mxu0 0.0
        %714 = vmatpush1.msra.mxu0 0.0
        %715 = vmatprep.subr.mxu0 0.0
        %716 = vmatpush1.msra.mxu0 0.0
        %717 = vmatprep.subr.mxu0 0.0
        %718 = vmatpush1.msra.mxu0 0.0
        %719 = vmatprep.subr.mxu0 0.0
        %720 = vmatpush1.msra.mxu0 0.0
        %721 = vmatprep.subr.mxu0 0.0
        %722 = vmatpush1.msra.mxu0 0.0
        %723 = vmatprep.subr.mxu0 0.0
        %724 = vmatpush1.msra.mxu0 0.0
        %725 = vmatprep.subr.mxu0 0.0
        %726 = vmatpush1.msra.mxu0 0.0
        %727 = vmatprep.subr.mxu0 0.0
        %728 = vmatpush1.msra.mxu0 0.0
        %729 = vmatprep.subr.mxu0 0.0
        %730 = vmatpush1.msra.mxu0 0.0
        %731 = vmatprep.subr.mxu0 0.0
        %732 = vmatpush1.msra.mxu0 0.0
        %733 = vmatprep.subr.mxu0 0.0
        %734 = vmatpush1.msra.mxu0 0.0
        %735 = vmatprep.subr.mxu0 0.0
        %736 = vmatpush1.msra.mxu0 0.0
        %737 = vmatprep.subr.mxu0 0.0
        %738 = vmatpush1.msra.mxu0 0.0
        %739 = vmatprep.subr.mxu0 0.0
        %740 = vmatpush1.msra.mxu0 0.0
        %741 = vmatprep.subr.mxu0 0.0
        %742 = vmatpush1.msra.mxu0 0.0
        %743 = vmatprep.subr.mxu0 0.0
        %744 = vmatpush1.msra.mxu0 0.0
        %745 = vmatprep.subr.mxu0 0.0
        %746 = vmatpush1.msra.mxu0 0.0
        %747 = vmatprep.subr.mxu0 0.0
        %748 = vmatpush1.msra.mxu0 0.0
        %749 = vmatprep.subr.mxu0 0.0
        %750 = vmatpush1.msra.mxu0 0.0
        %751 = vmatprep.subr.mxu0 0.0
        %752 = vmatpush1.msra.mxu0 0.0
        %753 = vmatprep.subr.mxu0 0.0
        %754 = vmatpush1.msra.mxu0 0.0
        %755 = vmatprep.subr.mxu0 0.0
        %756 = vmatpush1.msra.mxu0 0.0
        %757 = vmatprep.subr.mxu0 0.0
        %758 = vmatpush1.msra.mxu0 0.0
        %759 = vmatprep.subr.mxu0 0.0
        %760 = vmatpush1.msra.mxu0 0.0
        %761 = vmatprep.subr.mxu0 0.0
        %762 = vmatpush1.msra.mxu0 0.0
        %763 = vmatprep.subr.mxu0 0.0
        %764 = vmatpush1.msra.mxu0 0.0
        %765 = vmatprep.mubr.f32.mxu0 0.0
        %766 = vmatmul.mubr.f32.gmra.mrb[0].mxu0 %v691
        %v767 = vpop.f32.mrb[0].mxu0
        %v768 = vadd.f32 0.0, %v767
        %v769 = vpop.f32.mrb[0].mxu0
        %v770 = vadd.f32 0.0, %v769
        %771 = vmatprep.mubr.f32.mxu0 0.0
        %772 = vmatmul.mubr.f32.gmra.mrb[0].mxu0 %v694
        %v773 = vpop.f32.mrb[0].mxu0
        %v774 = vadd.f32 0.0, %v773
        %v775 = vpop.f32.mrb[0].mxu0
        %v776 = vadd.f32 0.0, %v775
        %777 = vdwg.mxu0
        %v778 = vld [vmem:[%s443] sm:$0xff]
        %v779 = vld [vmem:[%s443 + $0x8] sm:$0xff]
        %781 = vset.pattern.permute.xlu0 0
        %782 = vperm.xlu0 %781, %v778
        %v783 = vpop.permute.xlu0 %782
        %786 = vset.pattern.permute.xlu0 0
        %787 = vperm.xlu0 %786, %v779
        %v788 = vpop.permute.xlu0 %787
        %v790 = vadd.f32 %v590, %v783
        %v791 = vadd.f32 %v592, %v783
        %v792 = vadd.f32 %v596, %v788
        %v793 = vadd.f32 %v598, %v788
        %v794 = vrot.slane %v790, 4
        %v795 = vmax.f32 %v790, %v794
        %v796 = vrot.slane %v795, 2
        %v797 = vmax.f32 %v795, %v796
        %v798 = vrot.slane %v797, 1
        %v799 = vmax.f32 %v797, %v798
        %v800 = vrot.slane %v791, 4
        %v801 = vmax.f32 %v791, %v800
        %v802 = vrot.slane %v801, 2
        %v803 = vmax.f32 %v801, %v802
        %v804 = vrot.slane %v803, 1
        %v805 = vmax.f32 %v803, %v804
        %v806 = vrot.slane %v792, 4
        %v807 = vmax.f32 %v792, %v806
        %v808 = vrot.slane %v807, 2
        %v809 = vmax.f32 %v807, %v808
        %v810 = vrot.slane %v809, 1
        %v811 = vmax.f32 %v809, %v810
        %v812 = vrot.slane %v793, 4
        %v813 = vmax.f32 %v793, %v812
        %v814 = vrot.slane %v813, 2
        %v815 = vmax.f32 %v813, %v814
        %v816 = vrot.slane %v815, 1
        %v817 = vmax.f32 %v815, %v816
        %v818 = vsub.f32 %v790, %v799
        %v819 = vsub.f32 %v791, %v805
        %v820 = vsub.f32 %v792, %v811
        %v821 = vsub.f32 %v793, %v817
        %v822 = vmul.f32 %v818, 1.442695
        %v823 = vpow.pop %v822
        %v824 = vmul.f32 %v819, 1.442695
        %v825 = vpow.pop %v824
        %v826 = vmul.f32 %v820, 1.442695
        %v827 = vpow.pop %v826
        %v828 = vmul.f32 %v821, 1.442695
        %v829 = vpow.pop %v828
        %v830 = vrot.slane %v823, 4
        %v831 = vadd.f32 %v823, %v830
        %v832 = vrot.slane %v831, 2
        %v833 = vadd.f32 %v831, %v832
        %v834 = vrot.slane %v833, 1
        %v835 = vadd.f32 %v833, %v834
        %v836 = vrot.slane %v825, 4
        %v837 = vadd.f32 %v825, %v836
        %v838 = vrot.slane %v837, 2
        %v839 = vadd.f32 %v837, %v838
        %v840 = vrot.slane %v839, 1
        %v841 = vadd.f32 %v839, %v840
        %v842 = vrot.slane %v827, 4
        %v843 = vadd.f32 %v827, %v842
        %v844 = vrot.slane %v843, 2
        %v845 = vadd.f32 %v843, %v844
        %v846 = vrot.slane %v845, 1
        %v847 = vadd.f32 %v845, %v846
        %v848 = vrot.slane %v829, 4
        %v849 = vadd.f32 %v829, %v848
        %v850 = vrot.slane %v849, 2
        %v851 = vadd.f32 %v849, %v850
        %v852 = vrot.slane %v851, 1
        %v853 = vadd.f32 %v851, %v852
        %v854 = vmul.f32 %v823, %v768
        %v855 = vmul.f32 %v825, %v770
        %v856 = vmul.f32 %v827, %v774
        %v857 = vmul.f32 %v829, %v776
        %v858 = vrot.slane %v854, 4
        %v859 = vadd.f32 %v854, %v858
        %v860 = vrot.slane %v859, 2
        %v861 = vadd.f32 %v859, %v860
        %v862 = vrot.slane %v861, 1
        %v863 = vadd.f32 %v861, %v862
        %v864 = vrot.slane %v855, 4
        %v865 = vadd.f32 %v855, %v864
        %v866 = vrot.slane %v865, 2
        %v867 = vadd.f32 %v865, %v866
        %v868 = vrot.slane %v867, 1
        %v869 = vadd.f32 %v867, %v868
        %v870 = vrot.slane %v856, 4
        %v871 = vadd.f32 %v856, %v870
        %v872 = vrot.slane %v871, 2
        %v873 = vadd.f32 %v871, %v872
        %v874 = vrot.slane %v873, 1
        %v875 = vadd.f32 %v873, %v874
        %v876 = vrot.slane %v857, 4
        %v877 = vadd.f32 %v857, %v876
        %v878 = vrot.slane %v877, 2
        %v879 = vadd.f32 %v877, %v878
        %v880 = vrot.slane %v879, 1
        %v881 = vadd.f32 %v879, %v880
        %v882 = vrcp.pop %v835
        %v883 = vmul.f32 %v863, %v882
        %v884 = vrcp.pop %v841
        %v885 = vmul.f32 %v869, %v884
        %v886 = vrcp.pop %v847
        %v887 = vmul.f32 %v875, %v886
        %v888 = vrcp.pop %v853
        %v889 = vmul.f32 %v881, %v888
        %v890 = vld [vmem:[#allocation6] sm:$0xff]
        %v891 = vld [vmem:[#allocation6 + $0x8] sm:$0xff]
        %v892 = vld [vmem:[#allocation6 + $0x10] sm:$0xff]
        %v893 = vld [vmem:[#allocation6 + $0x18] sm:$0xff]
        %v894 = vld [vmem:[#allocation6 + $0x20] sm:$0xff]
        %v895 = vld [vmem:[#allocation6 + $0x28] sm:$0xff]
        %v896 = vld [vmem:[#allocation6 + $0x30] sm:$0xff]
        %v897 = vld [vmem:[#allocation6 + $0x38] sm:$0xff]
        %v898 = vld [vmem:[#allocation6 + $0x40] sm:$0xff]
        %v899 = vld [vmem:[#allocation6 + $0x48] sm:$0xff]
        %v900 = vld [vmem:[#allocation6 + $0x50] sm:$0xff]
        %v901 = vld [vmem:[#allocation6 + $0x58] sm:$0xff]
        %v902 = vld [vmem:[#allocation6 + $0x60] sm:$0xff]
        %v903 = vld [vmem:[#allocation6 + $0x68] sm:$0xff]
        %v904 = vld [vmem:[#allocation6 + $0x70] sm:$0xff]
        %v905 = vld [vmem:[#allocation6 + $0x78] sm:$0xff]
        %v906 = vld [vmem:[#allocation6 + $0x80] sm:$0xff]
        %v907 = vld [vmem:[#allocation6 + $0x88] sm:$0xff]
        %v908 = vld [vmem:[#allocation6 + $0x90] sm:$0xff]
        %v909 = vld [vmem:[#allocation6 + $0x98] sm:$0xff]
        %v910 = vld [vmem:[#allocation6 + $0xa0] sm:$0xff]
        %v911 = vld [vmem:[#allocation6 + $0xa8] sm:$0xff]
        %v912 = vld [vmem:[#allocation6 + $0xb0] sm:$0xff]
        %v913 = vld [vmem:[#allocation6 + $0xb8] sm:$0xff]
        %v914 = vld [vmem:[#allocation6 + $0xc0] sm:$0xff]
        %v915 = vld [vmem:[#allocation6 + $0xc8] sm:$0xff]
        %v916 = vld [vmem:[#allocation6 + $0xd0] sm:$0xff]
        %v917 = vld [vmem:[#allocation6 + $0xd8] sm:$0xff]
        %v918 = vld [vmem:[#allocation6 + $0xe0] sm:$0xff]
        %v919 = vld [vmem:[#allocation6 + $0xe8] sm:$0xff]
        %v920 = vld [vmem:[#allocation6 + $0xf0] sm:$0xff]
        %v921 = vld [vmem:[#allocation6 + $0xf8] sm:$0xff]
        %v922 = vld [vmem:[#allocation2] sm:$0x1]
        %v924 = vlaneseq
        %v925 = vshrl.u32 %v924, 7
        %v926 = vsub.s32 0, %v925
        %v927 = vrot.slane %v922, %v926
        %928 = vset.pattern.permute.xlu0 0
        %929 = vperm.xlu0 %928, %v927
        %v930 = vpop.permute.xlu0 %929
        %vm936 = vcmask 1041409
        %v937 = vsel %vm936, %v887, %v883
        %v938 = vsel %vm936, %v889, %v885
        %941 = vmatprep.subr.mxu0 0.0
        %942 = vmatpush1.msra.mxu0 %v890
        %943 = vmatprep.subr.mxu0 0.0
        %944 = vmatpush1.msra.mxu0 %v891
        %945 = vmatprep.subr.mxu0 0.0
        %946 = vmatpush1.msra.mxu0 %v892
        %947 = vmatprep.subr.mxu0 0.0
        %948 = vmatpush1.msra.mxu0 %v893
        %949 = vmatprep.subr.mxu0 0.0
        %950 = vmatpush1.msra.mxu0 %v894
        %951 = vmatprep.subr.mxu0 0.0
        %952 = vmatpush1.msra.mxu0 %v895
        %953 = vmatprep.subr.mxu0 0.0
        %954 = vmatpush1.msra.mxu0 %v896
        %955 = vmatprep.subr.mxu0 0.0
        %956 = vmatpush1.msra.mxu0 %v897
        %957 = vmatprep.subr.mxu0 0.0
        %958 = vmatpush1.msra.mxu0 %v898
        %959 = vmatprep.subr.mxu0 0.0
        %960 = vmatpush1.msra.mxu0 %v899
        %961 = vmatprep.subr.mxu0 0.0
        %962 = vmatpush1.msra.mxu0 %v900
        %963 = vmatprep.subr.mxu0 0.0
        %964 = vmatpush1.msra.mxu0 %v901
        %965 = vmatprep.subr.mxu0 0.0
        %966 = vmatpush1.msra.mxu0 %v902
        %967 = vmatprep.subr.mxu0 0.0
        %968 = vmatpush1.msra.mxu0 %v903
        %969 = vmatprep.subr.mxu0 0.0
        %970 = vmatpush1.msra.mxu0 %v904
        %971 = vmatprep.subr.mxu0 0.0
        %972 = vmatpush1.msra.mxu0 %v905
        %973 = vmatprep.subr.mxu0 0.0
        %974 = vmatpush1.msra.mxu0 %v906
        %975 = vmatprep.subr.mxu0 0.0
        %976 = vmatpush1.msra.mxu0 %v907
        %977 = vmatprep.subr.mxu0 0.0
        %978 = vmatpush1.msra.mxu0 %v908
        %979 = vmatprep.subr.mxu0 0.0
        %980 = vmatpush1.msra.mxu0 %v909
        %981 = vmatprep.subr.mxu0 0.0
        %982 = vmatpush1.msra.mxu0 %v910
        %983 = vmatprep.subr.mxu0 0.0
        %984 = vmatpush1.msra.mxu0 %v911
        %985 = vmatprep.subr.mxu0 0.0
        %986 = vmatpush1.msra.mxu0 %v912
        %987 = vmatprep.subr.mxu0 0.0
        %988 = vmatpush1.msra.mxu0 %v913
        %989 = vmatprep.subr.mxu0 0.0
        %990 = vmatpush1.msra.mxu0 %v914
        %991 = vmatprep.subr.mxu0 0.0
        %992 = vmatpush1.msra.mxu0 %v915
        %993 = vmatprep.subr.mxu0 0.0
        %994 = vmatpush1.msra.mxu0 %v916
        %995 = vmatprep.subr.mxu0 0.0
        %996 = vmatpush1.msra.mxu0 %v917
        %997 = vmatprep.subr.mxu0 0.0
        %998 = vmatpush1.msra.mxu0 %v918
        %999 = vmatprep.subr.mxu0 0.0
        %1000 = vmatpush1.msra.mxu0 %v919
        %1001 = vmatprep.subr.mxu0 0.0
        %1002 = vmatpush1.msra.mxu0 %v920
        %1003 = vmatprep.subr.mxu0 0.0
        %1004 = vmatpush1.msra.mxu0 %v921
        %1005 = vmatprep.mubr.f32.mxu0 %v938
        %1006 = vmatmul.mubr.f32.gmra.mrb[0].mxu0 %v937
        %v1007 = vpop.f32.mrb[0].mxu0
        %v1008 = vadd.f32 %v930, %v1007
        %v1009 = vpop.f32.mrb[0].mxu0
        %1010 = vdwg.mxu0
        %v1011 = vtanh.pop %v1008
        %1012 = vst [vmem:[%s437] sm:$0x3] %v1011
        %s1013 = sand.u32 %s280, 1
        %s1014 = scalar_lea.sflag [#allocation5], %s1013
        %s1015 = sand.u32 %s280, 1
        %s1016 = smul.addr %s1015, 2
        %s1017 = scalar_lea.vmem [#allocation8], %s1016
        // Predicated region
        $region73: #{tpu_custom_call.1} parent=63 // pred_check
          %p1018 = pneg %p290
        $region74: #{tpu_custom_call.1} parent=63 // pred_check_branch
          %1020 = sbr.rel (%p1018) target = $region76
        $region75: #{tpu_custom_call.1} parent=63 // pred_region
          %s1022 = ssub.s32 32, 32
          %1023 = vsyncadd %s1014, %s1022
          %s1024 = smul.addr %s31, 32
          %s1025 = scalar_lea.hbm %s11, %s1024
          %s1027 = sshll.u32 %s1017, 4
          %s1028 = int_to_ptr.vmem [resolvable:$true] %s1027
          %1030 = dma.vmem_to_hbm [thread:$0]  %s1028, 32, %s1025, %s1014
        $region76: #{tpu_custom_call.1} parent=63 // pred_fallthru
          _
      $region64: #{tpu_custom_call.1} parent=5 // pred_fallthru
        _
      %p1031 = scmp.le.s32.totalorder 2, %s26
      // Predicated region
      $region77: #{tpu_custom_call.1} parent=5 // pred_check
        %p1032 = pneg %p1031
      $region78: #{tpu_custom_call.1} parent=5 // pred_check_branch
        %1034 = sbr.rel (%p1032) target = $region80
      $region79: #{tpu_custom_call.1} parent=5 // pred_region
        %s1035 = ssub.s32 %s26, 2
        // Predicated region
        $region81: #{tpu_custom_call.1} parent=79 // pred_check
          %p1036 = pneg %p296
        $region82: #{tpu_custom_call.1} parent=79 // pred_check_branch
          %1038 = sbr.rel (%p1036) target = $region84
        $region83: #{tpu_custom_call.1} parent=79 // pred_region
          %s1039 = sand.u32 %s281, 1
          %s1040 = scalar_lea.sflag [#allocation5], %s1039
          %s1041 = sand.u32 %s281, 1
          %s1042 = smul.addr %s1041, 2
          %s1043 = scalar_lea.vmem [#allocation8], %s1042
          %1044 = dma.done %s1040, 32
        $region84: #{tpu_custom_call.1} parent=79 // pred_fallthru
          _
      $region80: #{tpu_custom_call.1} parent=5 // pred_fallthru
        _
    $region6: #{tpu_custom_call.1} parent=1 // loop_footer
      %s30 = sadd.s32 1, %s26
    $region7: #{tpu_custom_call.1} parent=1 // loop_footer_branch
      %25 = sbr.rel target = $region3
    $region8: #{tpu_custom_call.1} parent=1 // loop_exit
      _
    %1045 = vsyncpa [#allocation4], 1
    %s1046 = scalar_lea.sflag [#allocation4], 1
    %1047 = vsyncpa %s1046, 1
    %1048 = vsyncpa [#allocation7], 1
    %1049 = vsyncpa [#allocation5], 1
    %s1050 = scalar_lea.sflag [#allocation5], 1
    %1051 = vsyncpa %s1050, 1

</llo_original>
